<compile_context>
chip_gen: v7x
topology: tpu7x:2x2x1
jax: 0.10.0
libtpu: 0.0.40
codegen_flags: <defaults>
</compile_context>

<pallas_src>
import functools

import jax
import jax.numpy as jnp
from jax.experimental import pallas as pl
from jax.experimental.pallas import tpu as pltpu


def _additive_attention_kernel(ctx_ref, w1_ref, b1_ref, w2_ref,
                               out_ref, wts_ref, *, s_valid, mul_dtype):
    tb, s_pad, d = ctx_ref.shape
    v = w1_ref.shape[1]

    ctx = ctx_ref[...]                                   # (TB, S_pad, D)
    # Free merge of the leading dims: the wrapper pads S to the ctx sublane
    # tile, so this reshape never crosses an (8, 128) tile boundary.
    ctx2d = ctx.reshape(tb * s_pad, d)

    # proj: Linear(in_dim -> v_size) + Tanh   (MXU matmul, f32 accumulation).
    h = jnp.tanh(
        jnp.dot(ctx2d, w1_ref[...], preferred_element_type=jnp.float32)
        + b1_ref[...].astype(jnp.float32)                # (1, V) broadcast
    )                                                    # (TB*S_pad, V) f32

    # proj_v: Linear(v_size -> 1) as a VPU multiply + lane reduce (avoids an
    # N=1 MXU matmul).  The bias b2 is omitted: softmax is shift-invariant
    # and raw scores are never emitted, so it cancels exactly.
    h3 = h.reshape(tb, s_pad, v)                         # free: s_pad % 8 == 0
    w2_row = w2_ref[...].astype(jnp.float32)             # (1, V)
    scores = jnp.sum(h3 * w2_row, axis=-1)               # (TB, S_pad) f32

    if s_valid != s_pad:
        # Mask padded sequence positions out of the softmax.
        lane = jax.lax.broadcasted_iota(jnp.int32, (tb, s_pad), 1)
        scores = jnp.where(lane < s_valid, scores, jnp.float32(-1e30))

    # Softmax over the sequence (lane) axis.
    m = jnp.max(scores, axis=-1, keepdims=True)          # (TB, 1)
    e = jnp.exp(scores - m)                              # (TB, S_pad)
    w = e / jnp.sum(e, axis=-1, keepdims=True)           # (TB, S_pad) f32

    # Weighted sum over the sequence (sublane reduce).  bf16 inputs multiply
    # in bf16 with f32 accumulation on bf16-capable VPUs; otherwise f32.
    wm = w.astype(mul_dtype)[:, :, None] * ctx.astype(mul_dtype)
    out = jnp.sum(wm.astype(jnp.float32), axis=1)        # (TB, D) f32

    # TODO(synk): for production shapes with D or S < 128, repack the outputs
    # into a lane-dense layout (stores are masked vst.msk otherwise).
    out_ref[...] = out.astype(out_ref.dtype)             # (TB, D)
    wts_ref[...] = w.astype(wts_ref.dtype)               # (TB, S_pad)


def _device_kind():
    try:
        return jax.devices()[0].device_kind.lower()
    except Exception:
        return ""


def _vmem_capacity_bytes(kind):
    try:
        cap = getattr(pltpu.get_tpu_info(), "vmem_capacity_bytes", None)
        if cap:
            return int(cap)
    except Exception:
        pass
    if "v7" in kind:
        return 64 << 20
    if ("v6" in kind or "v5e" in kind or "v5 lite" in kind
            or "v5litepod" in kind):
        return 128 << 20
    return 64 << 20          # conservative default for unknown generations


def _num_tensorcores(kind):
    # 2-TC chips: v7x and megacore v4 / v5p.  v5e / v6e have a single TC.
    return 2 if any(t in kind for t in ("v7", "v4", "v5p")) else 1


def _pick_block_b(B, s_pad, D, V, ctx_bytes, w1_bytes, out_bytes,
                  vmem_limit, num_cores):
    """Pick the batch tile from a VMEM budget, then apply core-aware splits."""
    budget = int(vmem_limit * 0.65)
    # Constant-index weight operands are still double-buffered by the pipeline
    # (idle second buffer), so they are charged twice.
    fixed = 2 * (D * V * w1_bytes + 2 * V * 4)
    # Per batch row: double-buffered ctx tile + double-buffered outputs +
    # f32 intermediates (h, weighted-sum product, scores).
    per_row = (2 * s_pad * D * ctx_bytes
               + 2 * (D * out_bytes + s_pad * 4)
               + s_pad * V * 4
               + s_pad * D * 4
               + s_pad * 4)
    tb = max(1, (budget - fixed) // per_row)
    tb = int(min(tb, B))
    # On multi-TC chips give each core >= 2 pipelined steps (grid axis is
    # "parallel"); on single-core chips keep one big tile (no extra ~0.35us
    # step overhead / extra writeback).
    min_steps = 2 * num_cores if num_cores > 1 else 1
    if min_steps > 1 and B >= min_steps:
        tb = min(tb, pl.cdiv(B, min_steps))
    # Keep split batch tiles sublane-friendly.
    if 8 < tb < B:
        tb = (tb // 8) * 8
    return max(1, tb)


def additive_attention(context, w1, b1, w2, b2=None, *, block_b=None):
    """context: [B, S, D]; returns (outputs [B, D], weights [B, S] f32).

    `b2` (bias of the final Linear(v_size, 1)) is accepted for API parity but
    unused: softmax is shift-invariant and raw scores are never returned.
    """
    B, S, D = context.shape
    V = w1.shape[1]

    ctx_bytes = jnp.dtype(context.dtype).itemsize
    # Sublane tile of the ctx dtype: 8 rows (f32), 16 (bf16), 32 (int8).
    sublane = max(8, 8 * (4 // max(1, ctx_bytes)))
    s_pad = ((S + sublane - 1) // sublane) * sublane
    ctx_in = context if s_pad == S else jnp.pad(
        context, ((0, 0), (0, s_pad - S), (0, 0)))

    kind = _device_kind()
    num_cores = _num_tensorcores(kind)
    vmem_cap = _vmem_capacity_bytes(kind)
    # ~3/4 of physical VMEM: leaves headroom for compiler-internal scratch.
    vmem_limit = int(max(32 << 20, min((vmem_cap * 3) // 4, 100 << 20)))

    if block_b is None:
        tb = _pick_block_b(B, s_pad, D, V, ctx_bytes,
                           jnp.dtype(w1.dtype).itemsize,
                           ctx_bytes, vmem_limit, num_cores)
    else:
        tb = max(1, min(int(block_b), B))
    grid_b = pl.cdiv(B, tb)

    # bf16 multiply path for the weighted sum on bf16-capable VPUs (v6e/v7x);
    # v5e (no bf16 VALU) and f32 inputs keep the f32 path.
    is_v5e = ("v5e" in kind) or ("v5 lite" in kind) or ("v5litepod" in kind)
    if context.dtype == jnp.bfloat16 and not is_v5e:
        mul_dtype = jnp.bfloat16
    else:
        mul_dtype = jnp.float32

    b1_2d = b1.reshape(1, V)
    w2_row = w2.reshape(1, V)        # (V, 1) -> (1, V), same element order

    kernel = functools.partial(_additive_attention_kernel,
                               s_valid=S, mul_dtype=mul_dtype)

    out, wts = pl.pallas_call(
        kernel,
        out_shape=(
            jax.ShapeDtypeStruct((B, D), context.dtype),
            jax.ShapeDtypeStruct((B, s_pad), jnp.float32),
        ),
        grid_spec=pltpu.PrefetchScalarGridSpec(
            num_scalar_prefetch=0,
            grid=(grid_b,),
            in_specs=[
                pl.BlockSpec((tb, s_pad, D), lambda b: (b, 0, 0)),   # context
                # TODO(synk): sweep pipeline_mode=pl.Buffered(1) on the constant
                # weight operands / pl.Buffered(3) on ctx if the bundle shows
                # exposed DMA waits; the VMEM budget already reserves 2x weights.
                pl.BlockSpec((D, V), lambda b: (0, 0)),              # W1
                pl.BlockSpec((1, V), lambda b: (0, 0)),              # b1
                pl.BlockSpec((1, V), lambda b: (0, 0)),              # w2 (row)
            ],
            out_specs=[
                pl.BlockSpec((tb, D), lambda b: (b, 0)),             # outputs
                pl.BlockSpec((tb, s_pad), lambda b: (b, 0)),         # weights
            ],
        ),
        compiler_params=pltpu.CompilerParams(
            dimension_semantics=("parallel",),
            vmem_limit_bytes=vmem_limit,
        ),
    )(ctx_in, w1, b1_2d, w2_row)

    if s_pad != S:
        wts = wts[:, :S]
    return out, wts


def _reference(context, w1, b1, w2, b2):
    h = jnp.tanh(context @ w1 + b1)                 # [B, S, V]
    s = (h @ w2)[..., 0] + b2[0]                    # [B, S]
    w = jax.nn.softmax(s, axis=-1)                  # [B, S]
    out = jnp.einsum("bs,bsd->bd", w, context)      # [B, D]
    return out, w


if __name__ == "__main__":
    B, S, in_dim, v_size = 2, 8, 32, 64

    key = jax.random.PRNGKey(0)
    k_ctx, k_w1, k_b1, k_w2, k_b2 = jax.random.split(key, 5)

    context = jax.random.normal(k_ctx, (B, S, in_dim), dtype=jnp.float32)

    # Deterministic parameter init (shapes match nn.Linear(in_dim, v_size) and
    # nn.Linear(v_size, 1)); stored already transposed to [in, out].
    lim1 = 1.0 / (in_dim ** 0.5)
    lim2 = 1.0 / (v_size ** 0.5)
    w1 = jax.random.uniform(k_w1, (in_dim, v_size), jnp.float32, -lim1, lim1)
    b1 = jax.random.uniform(k_b1, (v_size,), jnp.float32, -lim1, lim1)
    w2 = jax.random.uniform(k_w2, (v_size, 1), jnp.float32, -lim2, lim2)
    b2 = jax.random.uniform(k_b2, (1,), jnp.float32, -lim2, lim2)

    out, wts = additive_attention(context, w1, b1, w2, b2)
    jax.block_until_ready((out, wts))

    ref_out, ref_wts = _reference(context, w1, b1, w2, b2)
    assert out.shape == (B, in_dim) and wts.shape == (B, S)
    assert jnp.allclose(out, ref_out, atol=1e-5, rtol=1e-5)
    assert jnp.allclose(wts, ref_wts, atol=1e-5, rtol=1e-5)

    print("KERNEL_OK")
</pallas_src>

<mosaic_0001>
module attributes {stable_mosaic.version = 11 : i64} {
  func.func @_additive_attention_kernel(%arg0: i32, %arg1: memref<2x8x32xf32, #tpu.memory_space<vmem>>, %arg2: memref<32x64xf32, #tpu.memory_space<vmem>>, %arg3: memref<1x64xf32, #tpu.memory_space<vmem>>, %arg4: memref<1x64xf32, #tpu.memory_space<vmem>>, %arg5: memref<2x32xf32, #tpu.memory_space<vmem>>, %arg6: memref<2x8xf32, #tpu.memory_space<vmem>>) attributes {dimension_semantics = [#tpu.dimension_semantics<parallel>], iteration_bounds = array<i64: 1>, scalar_prefetch = 0 : i64, scratch_operands = 0 : i64, tpu.core_type = #tpu.core_type<tc>, window_params = [{transform_indices = @transform_0, window_bounds = array<i64: 2, 8, 32>}, {pipeline_mode = #tpu.pipeline_mode<synchronous>, transform_indices = @transform_1, window_bounds = array<i64: 32, 64>}, {pipeline_mode = #tpu.pipeline_mode<synchronous>, transform_indices = @transform_2, window_bounds = array<i64: 1, 64>}, {pipeline_mode = #tpu.pipeline_mode<synchronous>, transform_indices = @transform_3, window_bounds = array<i64: 1, 64>}, {transform_indices = @transform_4, window_bounds = array<i64: 2, 32>}, {transform_indices = @transform_5, window_bounds = array<i64: 2, 8>}]} {
    %c0 = arith.constant 0 : index
    %c0_0 = arith.constant 0 : index
    %c0_1 = arith.constant 0 : index
    %0 = vector.load %arg1[%c0, %c0_0, %c0_1] : memref<2x8x32xf32, #tpu.memory_space<vmem>>, vector<2x8x32xf32>
    %1 = vector.shape_cast %0 : vector<2x8x32xf32> to vector<16x32xf32>
    %c0_2 = arith.constant 0 : index
    %c0_3 = arith.constant 0 : index
    %2 = vector.load %arg2[%c0_2, %c0_3] : memref<32x64xf32, #tpu.memory_space<vmem>>, vector<32x64xf32>
    %cst = arith.constant dense<0.000000e+00> : vector<16x64xf32>
    %3 = tpu.matmul %1, %2, %cst {dimension_numbers = #tpu.dot_dimension_numbers<[1], [0], [0], [1], [0, 0, 1, 1], [], []>} : vector<16x32xf32>, vector<32x64xf32>, vector<16x64xf32> -> vector<16x64xf32>
    %c0_4 = arith.constant 0 : index
    %c0_5 = arith.constant 0 : index
    %4 = vector.load %arg3[%c0_4, %c0_5] : memref<1x64xf32, #tpu.memory_space<vmem>>, vector<1x64xf32>
    %5 = vector.broadcast %4 : vector<1x64xf32> to vector<16x64xf32>
    %6 = arith.addf %3, %5 : vector<16x64xf32>
    %7 = math.tanh %6 : vector<16x64xf32>
    %8 = vector.shape_cast %7 : vector<16x64xf32> to vector<2x8x64xf32>
    %c0_6 = arith.constant 0 : index
    %c0_7 = arith.constant 0 : index
    %9 = vector.load %arg4[%c0_6, %c0_7] : memref<1x64xf32, #tpu.memory_space<vmem>>, vector<1x64xf32>
    %10 = vector.shape_cast %9 : vector<1x64xf32> to vector<1x1x64xf32>
    %11 = vector.broadcast %10 : vector<1x1x64xf32> to vector<2x8x64xf32>
    %12 = arith.mulf %8, %11 : vector<2x8x64xf32>
    %cst_8 = arith.constant dense<0.000000e+00> : vector<2x8xf32>
    %13 = vector.multi_reduction <add>, %12, %cst_8 [2] : vector<2x8x64xf32> to vector<2x8xf32>
    %cst_9 = arith.constant dense<0xFF800000> : vector<2xf32>
    %14 = vector.multi_reduction <maximumf>, %13, %cst_9 [1] : vector<2x8xf32> to vector<2xf32>
    %15 = vector.shape_cast %14 : vector<2xf32> to vector<2x1xf32>
    %16 = vector.broadcast %15 : vector<2x1xf32> to vector<2x8xf32>
    %17 = arith.subf %13, %16 : vector<2x8xf32>
    %18 = math.exp %17 : vector<2x8xf32>
    %cst_10 = arith.constant dense<0.000000e+00> : vector<2xf32>
    %19 = vector.multi_reduction <add>, %18, %cst_10 [1] : vector<2x8xf32> to vector<2xf32>
    %20 = vector.shape_cast %19 : vector<2xf32> to vector<2x1xf32>
    %21 = vector.broadcast %20 : vector<2x1xf32> to vector<2x8xf32>
    %22 = arith.divf %18, %21 : vector<2x8xf32>
    %23 = vector.shape_cast %22 : vector<2x8xf32> to vector<2x8x1xf32>
    %24 = vector.broadcast %23 : vector<2x8x1xf32> to vector<2x8x32xf32>
    %25 = arith.mulf %24, %0 : vector<2x8x32xf32>
    %cst_11 = arith.constant dense<0.000000e+00> : vector<2x32xf32>
    %26 = vector.multi_reduction <add>, %25, %cst_11 [1] : vector<2x8x32xf32> to vector<2x32xf32>
    %c0_12 = arith.constant 0 : index
    %c0_13 = arith.constant 0 : index
    %27 = vector.load %arg5[%c0_12, %c0_13] : memref<2x32xf32, #tpu.memory_space<vmem>>, vector<2x32xf32>
    tpu.vector_store %arg5[%c0_12, %c0_13], %26 {strides = array<i32>} : memref<2x32xf32, #tpu.memory_space<vmem>>, vector<2x32xf32>,
    %c0_14 = arith.constant 0 : index
    %c0_15 = arith.constant 0 : index
    %28 = vector.load %arg6[%c0_14, %c0_15] : memref<2x8xf32, #tpu.memory_space<vmem>>, vector<2x8xf32>
    tpu.vector_store %arg6[%c0_14, %c0_15], %22 {strides = array<i32>} : memref<2x8xf32, #tpu.memory_space<vmem>>, vector<2x8xf32>,
    return
  }
  func.func @transform_0(%arg0: i32) -> (i32, i32, i32) {
    %c0_i32 = arith.constant 0 : i32
    %c0_i32_0 = arith.constant 0 : i32
    %c0_i32_1 = arith.constant 0 : i32
    return %arg0, %c0_i32, %c0_i32_0 : i32, i32, i32
  }
  func.func @transform_1(%arg0: i32) -> (i32, i32) {
    %c0_i32 = arith.constant 0 : i32
    %c0_i32_0 = arith.constant 0 : i32
    %c0_i32_1 = arith.constant 0 : i32
    return %c0_i32, %c0_i32_0 : i32, i32
  }
  func.func @transform_2(%arg0: i32) -> (i32, i32) {
    %c0_i32 = arith.constant 0 : i32
    %c0_i32_0 = arith.constant 0 : i32
    %c0_i32_1 = arith.constant 0 : i32
    return %c0_i32, %c0_i32_0 : i32, i32
  }
  func.func @transform_3(%arg0: i32) -> (i32, i32) {
    %c0_i32 = arith.constant 0 : i32
    %c0_i32_0 = arith.constant 0 : i32
    %c0_i32_1 = arith.constant 0 : i32
    return %c0_i32, %c0_i32_0 : i32, i32
  }
  func.func @transform_4(%arg0: i32) -> (i32, i32) {
    %c0_i32 = arith.constant 0 : i32
    %c0_i32_0 = arith.constant 0 : i32
    return %arg0, %c0_i32 : i32, i32
  }
  func.func @transform_5(%arg0: i32) -> (i32, i32) {
    %c0_i32 = arith.constant 0 : i32
    %c0_i32_0 = arith.constant 0 : i32
    return %arg0, %c0_i32 : i32, i32
  }
}

</mosaic_0001>

<llo_original>
// kernel: tpu_custom_call.1
$region0: #{tpu_custom_call.1}
  #allocation0 [shape = 'u32[]', space=smem, size = 0x4, offset = 0x4, fixed_abs, tag = 'smem constant byte address 0x4 - core index']
  #allocation1 [shape = 'u32[144,128]{1,0:T(1,128)}', space=vmem, size = 0x12000, scoped, tag = 'internal scratch']
  %s0 = inlined_call_operand.hbm [shape: f32[2,8,32], index: 0, kind: input, shape index: {}]
  %s1 = inlined_call_operand.hbm [shape: f32[32,64], index: 1, kind: input, shape index: {}]
  %s2 = inlined_call_operand.vmem [shape: f32[1,64], index: 2, kind: input, shape index: {}]
  %s3 = inlined_call_operand.vmem [shape: f32[1,64], index: 3, kind: input, shape index: {}]
  %s4 = inlined_call_operand.hbm [shape: f32[2,32], index: 4, kind: output, shape index: {0}]
  %s5 = inlined_call_operand.hbm [shape: f32[2,8], index: 5, kind: output, shape index: {1}]
  %6 = xla_tuple %s4, %s5
  %s7 = sld [smem:[#allocation0]]
  $region42: #{tpu_custom_call.1} parent=0
    _
  %s9 = ssub.s32 1, %s7
  %s10 = scalar_select 0, %s9, %s7
  $region1: #{tpu_custom_call.1} parent=0
    #allocation2 [shape = 'u8[8192]{0}', space=vmem, size = 0x2000, scoped, tag = 'input window, operand 0, single buffered']
    #allocation3 [shape = 's32[1]{0}', space=sflag, size = 0x4, scoped, tag = 'scoped memory for tpu_custom_call.1']
    #allocation4 [shape = 's32[1]{0}', space=sflag, size = 0x4, scoped, tag = 'scoped memory for tpu_custom_call.1']
    #allocation5 [shape = 'u8[16384]{0}', space=vmem, size = 0x4000, scoped, tag = 'input window, operand 1, single buffered']
    #allocation6 [shape = 's32[1]{0}', space=sflag, size = 0x4, scoped, tag = 'scoped memory for tpu_custom_call.1']
    #allocation7 [shape = 'u8[1024]{0}', space=vmem, size = 0x400, scoped, tag = 'output window, operand 0, single buffered']
    #allocation8 [shape = 'u8[1024]{0}', space=vmem, size = 0x400, scoped, tag = 'output window, operand 1, single buffered']
    #allocation9 [shape = 's32[1]{0}', space=sflag, size = 0x4, scoped, tag = 'scoped memory for tpu_custom_call.1']
    %11 = vsyncpa [#allocation3], 0
    %12 = vsyncpa [#allocation6], 0
    %13 = vsyncpa [#allocation4], 0
    %14 = vsyncpa [#allocation9], 0
    // Predicated region
    $region2: #{tpu_custom_call.1} parent=1 // pred_check
      _
    $region3: #{tpu_custom_call.1} parent=1 // pred_check_branch
      %16 = sbr.rel (0) target = $region5
    $region4: #{tpu_custom_call.1} parent=1 // pred_region
      %s18 = ssub.s32 256, 256
      %19 = vsyncadd [#allocation3], %s18
      %s20 = sshll.u32 [#allocation2], 4
      %s21 = int_to_ptr.vmem [resolvable:$true] %s20
      %26 = dma.hbm_to_vmem [thread:$0]  %s0, 256, %s21, [#allocation3], 128, 128, 8
    $region5: #{tpu_custom_call.1} parent=1 // pred_fallthru
      _
    // Predicated region
    $region6: #{tpu_custom_call.1} parent=1 // pred_check
      _
    $region7: #{tpu_custom_call.1} parent=1 // pred_check_branch
      %28 = sbr.rel (0) target = $region9
    $region8: #{tpu_custom_call.1} parent=1 // pred_region
      %s30 = ssub.s32 512, 512
      %31 = vsyncadd [#allocation6], %s30
      %s32 = sshll.u32 [#allocation5], 4
      %s33 = int_to_ptr.vmem [resolvable:$true] %s32
      %38 = dma.hbm_to_vmem [thread:$0]  %s1, 512, %s33, [#allocation6], 128, 128, 8
    $region9: #{tpu_custom_call.1} parent=1 // pred_fallthru
      _
    // Predicated region
    $region10: #{tpu_custom_call.1} parent=1 // pred_check
      _
    $region11: #{tpu_custom_call.1} parent=1 // pred_check_branch
      %40 = sbr.rel (0) target = $region13
    $region12: #{tpu_custom_call.1} parent=1 // pred_region
      _
    $region13: #{tpu_custom_call.1} parent=1 // pred_fallthru
      _
    // Predicated region
    $region14: #{tpu_custom_call.1} parent=1 // pred_check
      _
    $region15: #{tpu_custom_call.1} parent=1 // pred_check_branch
      %42 = sbr.rel (0) target = $region17
    $region16: #{tpu_custom_call.1} parent=1 // pred_region
      _
    $region17: #{tpu_custom_call.1} parent=1 // pred_fallthru
      _
    // Predicated region
    $region18: #{tpu_custom_call.1} parent=1 // pred_check
      _
    $region19: #{tpu_custom_call.1} parent=1 // pred_check_branch
      %44 = sbr.rel (0) target = $region21
    $region20: #{tpu_custom_call.1} parent=1 // pred_region
      %45 = dma.done [#allocation3], 256
    $region21: #{tpu_custom_call.1} parent=1 // pred_fallthru
      _
    // Predicated region
    $region22: #{tpu_custom_call.1} parent=1 // pred_check
      _
    $region23: #{tpu_custom_call.1} parent=1 // pred_check_branch
      %47 = sbr.rel (0) target = $region25
    $region24: #{tpu_custom_call.1} parent=1 // pred_region
      %48 = dma.done [#allocation6], 512
    $region25: #{tpu_custom_call.1} parent=1 // pred_fallthru
      _
    %v49 = vld [vmem:[#allocation2] sm:$0xff]
    %v50 = vld [vmem:[#allocation2 + $0x8] sm:$0xff]
    %v51 = vld [vmem:[#allocation5] sm:$0xff]
    %v52 = vld [vmem:[#allocation5 + $0x8] sm:$0xff]
    %v53 = vld [vmem:[#allocation5 + $0x10] sm:$0xff]
    %v54 = vld [vmem:[#allocation5 + $0x18] sm:$0xff]
    %v55 = vld [vmem:[%s2] sm:$0x1]
    %v57 = vlaneseq
    %v58 = vshrl.u32 %v57, 7
    %v59 = vsub.s32 0, %v58
    %v60 = vrot.slane %v55, %v59
    %vm62 = vcmask 261120
    %v64 = vsel %vm62, %v49, 0
    %v67 = vsel %vm62, %v50, 0
    %69 = vmatprep.subr.mxu0 0.0
    %70 = vmatpush1.msra.mxu0 %v51
    %71 = vmatprep.subr.mxu0 0.0
    %72 = vmatpush1.msra.mxu0 %v52
    %73 = vmatprep.subr.mxu0 0.0
    %74 = vmatpush1.msra.mxu0 %v53
    %75 = vmatprep.subr.mxu0 0.0
    %76 = vmatpush1.msra.mxu0 %v54
    %77 = vmatprep.subr.mxu0 0.0
    %78 = vmatpush1.msra.mxu0 0.0
    %79 = vmatprep.subr.mxu0 0.0
    %80 = vmatpush1.msra.mxu0 0.0
    %81 = vmatprep.subr.mxu0 0.0
    %82 = vmatpush1.msra.mxu0 0.0
    %83 = vmatprep.subr.mxu0 0.0
    %84 = vmatpush1.msra.mxu0 0.0
    %85 = vmatprep.subr.mxu0 0.0
    %86 = vmatpush1.msra.mxu0 0.0
    %87 = vmatprep.subr.mxu0 0.0
    %88 = vmatpush1.msra.mxu0 0.0
    %89 = vmatprep.subr.mxu0 0.0
    %90 = vmatpush1.msra.mxu0 0.0
    %91 = vmatprep.subr.mxu0 0.0
    %92 = vmatpush1.msra.mxu0 0.0
    %93 = vmatprep.subr.mxu0 0.0
    %94 = vmatpush1.msra.mxu0 0.0
    %95 = vmatprep.subr.mxu0 0.0
    %96 = vmatpush1.msra.mxu0 0.0
    %97 = vmatprep.subr.mxu0 0.0
    %98 = vmatpush1.msra.mxu0 0.0
    %99 = vmatprep.subr.mxu0 0.0
    %100 = vmatpush1.msra.mxu0 0.0
    %101 = vmatprep.subr.mxu0 0.0
    %102 = vmatpush1.msra.mxu0 0.0
    %103 = vmatprep.subr.mxu0 0.0
    %104 = vmatpush1.msra.mxu0 0.0
    %105 = vmatprep.subr.mxu0 0.0
    %106 = vmatpush1.msra.mxu0 0.0
    %107 = vmatprep.subr.mxu0 0.0
    %108 = vmatpush1.msra.mxu0 0.0
    %109 = vmatprep.subr.mxu0 0.0
    %110 = vmatpush1.msra.mxu0 0.0
    %111 = vmatprep.subr.mxu0 0.0
    %112 = vmatpush1.msra.mxu0 0.0
    %113 = vmatprep.subr.mxu0 0.0
    %114 = vmatpush1.msra.mxu0 0.0
    %115 = vmatprep.subr.mxu0 0.0
    %116 = vmatpush1.msra.mxu0 0.0
    %117 = vmatprep.subr.mxu0 0.0
    %118 = vmatpush1.msra.mxu0 0.0
    %119 = vmatprep.subr.mxu0 0.0
    %120 = vmatpush1.msra.mxu0 0.0
    %121 = vmatprep.subr.mxu0 0.0
    %122 = vmatpush1.msra.mxu0 0.0
    %123 = vmatprep.subr.mxu0 0.0
    %124 = vmatpush1.msra.mxu0 0.0
    %125 = vmatprep.subr.mxu0 0.0
    %126 = vmatpush1.msra.mxu0 0.0
    %127 = vmatprep.subr.mxu0 0.0
    %128 = vmatpush1.msra.mxu0 0.0
    %129 = vmatprep.subr.mxu0 0.0
    %130 = vmatpush1.msra.mxu0 0.0
    %131 = vmatprep.subr.mxu0 0.0
    %132 = vmatpush1.msra.mxu0 0.0
    %133 = vmatprep.mubr.f32.mxu0 0.0
    %134 = vmatmul.mubr.f32.gmra.mrb[0].mxu0 %v64
    %v135 = vpop.f32.mrb[0].mxu0
    %v136 = vadd.f32 %v60, %v135
    %v137 = vpop.f32.mrb[0].mxu0
    %138 = vmatprep.mubr.f32.mxu0 0.0
    %139 = vmatmul.mubr.f32.gmra.mrb[0].mxu0 %v67
    %v140 = vpop.f32.mrb[0].mxu0
    %v141 = vadd.f32 %v60, %v140
    %v142 = vpop.f32.mrb[0].mxu0
    %143 = vdwg.mxu0
    %v144 = vtanh.pop %v136
    %v145 = vtanh.pop %v141
    %v146 = vld [vmem:[%s3] sm:$0x1]
    %v148 = vlaneseq
    %v149 = vshrl.u32 %v148, 7
    %v150 = vsub.s32 0, %v149
    %v151 = vrot.slane %v146, %v150
    %v153 = vmul.f32 %v144, %v151
    %v154 = vmul.f32 %v145, %v151
    %vm155 = vcmask 523264
    %v156 = vsel %vm155, %v153, 0.0
    %157 = vadd.xlane.f32.xlu0 %v156
    %v158 = vpop.xlane.xlu0 %157
    %v159 = vsel %vm155, %v154, 0.0
    %160 = vadd.xlane.f32.xlu0 %v159
    %v161 = vpop.xlane.xlu0 %160
    %v164 = vlaneseq
    %v165 = vand.u32 %v164, 127
    %v166 = vlaneseq
    %v167 = vshrl.u32 %v166, 7
    %v168 = vsub.s32 %v165, %v167
    %v169 = vrot.slane %v158, %v168
    %v170 = vlaneseq
    %v171 = vshrl.u32 %v170, 7
    %v172 = vsub.s32 %v165, %v171
    %v173 = vrot.slane %v161, %v172
    %vm174 = vcmask 1041409
    %v175 = vsel %vm174, %v173, %v169
    %vm177 = vcmask 58368
    %v178 = vsel %vm177, %v175, -inf
    %179 = vmax.xlane.f32.xlu0 %v178
    %v180 = vpop.xlane.xlu0 %179
    %v182 = vlaneseq
    %v183 = vshrl.u32 %v182, 7
    %v184 = vsub.s32 0, %v183
    %v185 = vrot.slane %v180, %v184
    %v186 = vlaneseq
    %v187 = vshrl.u32 %v186, 7
    %v188 = vsub.s32 1, %v187
    %v189 = vrot.slane %v180, %v188
    %v192 = vsub.f32 %v158, %v185
    %v193 = vsub.f32 %v161, %v189
    %v194 = vmul.f32 %v192, 1.442695
    %v195 = vpow.pop %v194
    %v196 = vmul.f32 %v193, 1.442695
    %v197 = vpow.pop %v196
    %200 = vset.pattern.permute.xlu0 0
    %201 = vperm.xlu0 %200, %v195
    %v202 = vpop.permute.xlu0 %201
    %203 = vset.pattern.permute.xlu0 0
    %204 = vperm.xlu0 %203, %v197
    %v205 = vpop.permute.xlu0 %204
    %v206 = vlaneseq
    %v207 = vshrl.u32 %v206, 7
    %v208 = vsub.s32 %v165, %v207
    %v209 = vrot.slane %v202, %v208
    %v210 = vlaneseq
    %v211 = vshrl.u32 %v210, 7
    %v212 = vsub.s32 %v165, %v211
    %v213 = vrot.slane %v205, %v212
    %v214 = vsel %vm174, %v213, %v209
    %v216 = vsel %vm177, %v214, 0.0
    %217 = vadd.xlane.f32.xlu0 %v216
    %v218 = vpop.xlane.xlu0 %217
    %v220 = vlaneseq
    %v221 = vshrl.u32 %v220, 7
    %v222 = vsub.s32 0, %v221
    %v223 = vrot.slane %v218, %v222
    %v224 = vlaneseq
    %v225 = vshrl.u32 %v224, 7
    %v226 = vsub.s32 1, %v225
    %v227 = vrot.slane %v218, %v226
    %v230 = vrcp.pop %v223
    %v231 = vmul.f32 %v195, %v230
    %v232 = vrcp.pop %v227
    %v233 = vmul.f32 %v197, %v232
    %235 = vset.pattern.permute.xlu0 0
    %236 = vperm.xlu0 %235, %v231
    %v237 = vpop.permute.xlu0 %236
    %240 = vset.pattern.permute.xlu0 0
    %241 = vperm.xlu0 %240, %v233
    %v242 = vpop.permute.xlu0 %241
    %v244 = vmul.f32 %v237, %v49
    %v245 = vmul.f32 %v242, %v50
    %v246 = vsel %vm62, %v244, 0.0
    %v247 = vrot.slane %v246, 4
    %v248 = vadd.f32 %v246, %v247
    %v249 = vrot.slane %v248, 2
    %v250 = vadd.f32 %v248, %v249
    %v251 = vrot.slane %v250, 1
    %v252 = vadd.f32 %v250, %v251
    %v253 = vsel %vm62, %v245, 0.0
    %v254 = vrot.slane %v253, 4
    %v255 = vadd.f32 %v253, %v254
    %v256 = vrot.slane %v255, 2
    %v257 = vadd.f32 %v255, %v256
    %v258 = vrot.slane %v257, 1
    %v259 = vadd.f32 %v257, %v258
    %v262 = vsel %vm174, %v259, %v252
    %vm264 = vcmask 254976
    %265 = vst.msk [vmem:[#allocation7] sm:$0x3] %vm264, %v262
    %v266 = vlaneseq
    %v267 = vshrl.u32 %v266, 7
    %v268 = vsub.s32 %v165, %v267
    %v269 = vrot.slane %v237, %v268
    %v270 = vlaneseq
    %v271 = vshrl.u32 %v270, 7
    %v272 = vsub.s32 %v165, %v271
    %v273 = vrot.slane %v242, %v272
    %v274 = vsel %vm174, %v273, %v269
    %276 = vst.msk [vmem:[#allocation8] sm:$0x3] %vm177, %v274
    // Predicated region
    $region26: #{tpu_custom_call.1} parent=1 // pred_check
      _
    $region27: #{tpu_custom_call.1} parent=1 // pred_check_branch
      %278 = sbr.rel (0) target = $region29
    $region28: #{tpu_custom_call.1} parent=1 // pred_region
      %s280 = ssub.s32 32, 32
      %281 = vsyncadd [#allocation4], %s280
      %s283 = sshll.u32 [#allocation7], 4
      %s284 = int_to_ptr.vmem [resolvable:$true] %s283
      %286 = dma.vmem_to_hbm [thread:$0]  %s284, 32, %s4, [#allocation4]
    $region29: #{tpu_custom_call.1} parent=1 // pred_fallthru
      _
    // Predicated region
    $region30: #{tpu_custom_call.1} parent=1 // pred_check
      _
    $region31: #{tpu_custom_call.1} parent=1 // pred_check_branch
      %288 = sbr.rel (0) target = $region33
    $region32: #{tpu_custom_call.1} parent=1 // pred_region
      %s290 = ssub.s32 32, 32
      %291 = vsyncadd [#allocation9], %s290
      %s293 = sshll.u32 [#allocation8], 4
      %s294 = int_to_ptr.vmem [resolvable:$true] %s293
      %296 = dma.vmem_to_hbm [thread:$0]  %s294, 32, %s5, [#allocation9]
    $region33: #{tpu_custom_call.1} parent=1 // pred_fallthru
      _
    // Predicated region
    $region34: #{tpu_custom_call.1} parent=1 // pred_check
      _
    $region35: #{tpu_custom_call.1} parent=1 // pred_check_branch
      %298 = sbr.rel (0) target = $region37
    $region36: #{tpu_custom_call.1} parent=1 // pred_region
      %299 = dma.done [#allocation4], 32
    $region37: #{tpu_custom_call.1} parent=1 // pred_fallthru
      _
    // Predicated region
    $region38: #{tpu_custom_call.1} parent=1 // pred_check
      _
    $region39: #{tpu_custom_call.1} parent=1 // pred_check_branch
      %301 = sbr.rel (0) target = $region41
    $region40: #{tpu_custom_call.1} parent=1 // pred_region
      %302 = dma.done [#allocation9], 32
    $region41: #{tpu_custom_call.1} parent=1 // pred_fallthru
      _
    %303 = vsyncpa [#allocation3], 1
    %304 = vsyncpa [#allocation6], 1
    %305 = vsyncpa [#allocation4], 1
    %306 = vsyncpa [#allocation9], 1

</llo_original>
